<compile_context>
chip_gen: v5e
topology: v5e:2x2
jax: 0.10.0
libtpu: 0.0.40
codegen_flags: <defaults>
</compile_context>

<pallas_src>
import functools
import warnings

import jax
import jax.numpy as jnp
from jax import lax
from jax.experimental import pallas as pl
from jax.experimental.pallas import tpu as pltpu


def _round_up(n, m):
    return ((n + m - 1) // m) * m


def _itemsize(dt):
    return jnp.dtype(dt).itemsize


def _sublane_multiple(dt):
    # Rows per packed sublane tile: 8 for 4-byte, 16 for 2-byte, 32 for 1-byte.
    return max(8, 32 // _itemsize(dt))


def _vmem_cap_bytes():
    """Usable VMEM budget: physical capacity minus headroom for Mosaic
    internal scratch / semaphores (generation-aware)."""
    try:
        cap = pltpu.get_tpu_info().vmem_capacity_bytes
    except Exception:
        cap = 64 << 20  # conservative (v7x-sized) fallback
    return max(cap - (12 << 20), 24 << 20)


def _vpu_has_bf16():
    """True on chips with a bf16 VPU/EUP datapath (v6e/v7x); False on v5e and
    older, where a bf16 epilogue only adds pack/unpack work."""
    try:
        kind = jax.devices()[0].device_kind.lower()
    except Exception:
        return False
    return not any(t in kind for t in ("v2", "v3", "v4", "v5"))


# ---------------------------------------------------------------------------
# Kernel.  grid = (batch tiles, K tiles); K (reduction) axis is last and
# "arbitrary"; the f32 accumulator lives in VMEM scratch across K steps.
# ---------------------------------------------------------------------------
def _rl_projection_kernel(x_ref, wt_ref, p_ref, o_ref, acc_ref,
                          *, inv_n, bf16_eup):
    k = pl.program_id(1)

    @pl.when(k == 0)
    def _init():
        acc_ref[...] = jnp.zeros_like(acc_ref)

    # Native-dtype operands straight to the MXU; f32 accumulation.
    acc_ref[...] += jnp.dot(x_ref[...], wt_ref[...],
                            preferred_element_type=jnp.float32)

    @pl.when(k == pl.num_programs(1) - 1)
    def _epilogue():
        y = acc_ref[...] + p_ref[0:1, :]                    # + bias (f32)

        # One-pass LayerNorm stats (biased variance, eps=1e-5), all in f32.
        s = jnp.sum(y, axis=-1, keepdims=True)
        sq = jnp.sum(y * y, axis=-1, keepdims=True)
        mean = s * inv_n
        var = jnp.maximum(sq * inv_n - mean * mean, 0.0)
        yhat = (y - mean) * lax.rsqrt(var + 1e-5)

        z = yhat * p_ref[1:2, :] + p_ref[2:3, :]            # affine in f32
        if bf16_eup and o_ref.dtype == jnp.bfloat16:
            o_ref[...] = jnp.tanh(z.astype(jnp.bfloat16))   # bf16 EUP tanh
        else:
            o_ref[...] = jnp.tanh(z).astype(o_ref.dtype)    # f32 tanh (v5e)


# ---------------------------------------------------------------------------
# Tile selection / VMEM budgeting.
# ---------------------------------------------------------------------------
def _pick_tile_k(in_dim, out_dim, w_it, cap):
    """Whole weight resident when it fits the per-generation budget; otherwise
    K-tile in multiples of 128 that divide in_dim."""
    budget = max(cap // 3, 8 << 20)        # ~17 MiB on v7x, ~38 MiB on v5e/v6e
    if in_dim * out_dim * w_it <= budget or in_dim % 128 != 0:
        return in_dim
    for m in range(in_dim // 128, 0, -1):
        tk = m * 128
        if in_dim % tk == 0 and tk * out_dim * w_it <= budget:
            return tk
    return 128


def _pick_tile_b(tile_k, out_dim, x_it, w_it, o_it, wt_bufs, cap, sub):
    fixed = wt_bufs * tile_k * out_dim * w_it + 2 * 3 * out_dim * 4
    per_row = 2 * tile_k * x_it + 2 * out_dim * o_it + out_dim * 4
    budget = cap - (4 << 20)
    for cand in (1024, 512, 256, 128, 64, 32, 16, 8):
        tb = _round_up(cand, sub)
        if fixed + tb * per_row <= budget:
            return tb
    return sub


def _vmem_limit_bytes(tile_b, tile_k, out_dim, x_it, w_it, o_it, wt_bufs, cap):
    need = (2 * tile_b * tile_k * x_it            # double-buffered x tiles
            + wt_bufs * tile_k * out_dim * w_it   # weight slab(s)
            + 2 * 3 * out_dim * 4                 # params
            + 2 * tile_b * out_dim * o_it         # double-buffered out tiles
            + tile_b * out_dim * 4)               # f32 accumulator scratch
    return int(min(max(need + (8 << 20), 32 << 20), cap))


# ---------------------------------------------------------------------------
# Entry points.
# ---------------------------------------------------------------------------
@functools.partial(jax.jit, static_argnames=("tile_b", "tile_k"))
def rl_projection_wt(x, wt, params, *, tile_b=None, tile_k=None):
    """Fused Linear + LayerNorm + Tanh.

    x:      (..., in_dim)       leading dims are flattened into the batch
    wt:     (in_dim, out_dim)   pre-transposed Linear weight (store it this way)
    params: (3, out_dim) f32    rows are [bias, gamma, beta]

    For best throughput keep out_dim a multiple of 128 (lane-dense stores,
    full MXU columns) and store x / wt in bf16 (bf16-native MXU).
    """
    in_dim = x.shape[-1]
    orig_lead = x.shape[:-1]
    if x.ndim != 2:
        x = x.reshape(-1, in_dim)
    B = x.shape[0]
    out_dim = wt.shape[1]
    if wt.shape[0] != in_dim:
        raise ValueError(f"wt must be (in_dim, out_dim); got {wt.shape}")
    if params.shape != (3, out_dim):
        raise ValueError(f"params must be (3, {out_dim}); got {params.shape}")
    if params.dtype != jnp.float32:
        params = params.astype(jnp.float32)
    if out_dim % 128 != 0:
        warnings.warn(
            f"RLProjection out_dim={out_dim} is not a multiple of 128; stores "
            "become masked and MXU columns / LN lanes are underused.")

    out_dtype = x.dtype
    x_it, w_it, o_it = _itemsize(x.dtype), _itemsize(wt.dtype), _itemsize(out_dtype)
    sub = _sublane_multiple(x.dtype)
    cap = _vmem_cap_bytes()

    # ---- K (in_dim) tiling: whole weight resident unless it is too big. ----
    if tile_k is None:
        tile_k = _pick_tile_k(in_dim, out_dim, w_it, cap)
    if in_dim % tile_k != 0:
        raise ValueError(f"tile_k={tile_k} must divide in_dim={in_dim}")
    num_k = in_dim // tile_k

    # Single-buffer the weight when it is grid-invariant (no K tiling) and
    # large; double-buffer when K-tiled so the next slab DMA overlaps compute.
    wt_bytes = tile_k * out_dim * w_it
    single_buffer_wt = (num_k == 1) and wt_bytes >= (4 << 20)
    wt_bufs = 1 if single_buffer_wt else 2

    # ---- Batch tiling: as big as the VMEM budget allows, dtype-aligned. ----
    if tile_b is None:
        tile_b = _pick_tile_b(tile_k, out_dim, x_it, w_it, o_it, wt_bufs, cap, sub)
    tile_b = max(_round_up(min(tile_b, _round_up(B, sub)), sub), sub)
    # Guarantee >=2 batch grid steps when possible so the "parallel" axis can
    # shard across both v7x TensorCores (no cost on single-TC v5e/v6e).
    if pl.cdiv(B, tile_b) == 1 and B > sub:
        tile_b = _round_up(pl.cdiv(B, 2), sub)
    num_b = pl.cdiv(B, tile_b)            # ragged tail handled by Pallas masking

    wt_spec_kwargs = {}
    if single_buffer_wt:
        wt_spec_kwargs["pipeline_mode"] = pl.Buffered(1)

    kernel = functools.partial(_rl_projection_kernel,
                               inv_n=1.0 / out_dim,
                               bf16_eup=_vpu_has_bf16())

    out = pl.pallas_call(
        kernel,
        out_shape=jax.ShapeDtypeStruct((B, out_dim), out_dtype),
        grid_spec=pltpu.PrefetchScalarGridSpec(
            num_scalar_prefetch=0,
            grid=(num_b, num_k),
            in_specs=[
                pl.BlockSpec((tile_b, tile_k), lambda i, k: (i, k)),     # x
                pl.BlockSpec((tile_k, out_dim), lambda i, k: (k, 0),
                             **wt_spec_kwargs),                          # Wt
                pl.BlockSpec((3, out_dim), lambda i, k: (0, 0)),         # b/g/beta
            ],
            out_specs=pl.BlockSpec((tile_b, out_dim), lambda i, k: (i, 0)),
            scratch_shapes=[pltpu.VMEM((tile_b, out_dim), jnp.float32)],
        ),
        compiler_params=pltpu.CompilerParams(
            dimension_semantics=("parallel", "arbitrary"),
            vmem_limit_bytes=_vmem_limit_bytes(
                tile_b, tile_k, out_dim, x_it, w_it, o_it, wt_bufs, cap),
        ),
    )(x, wt, params)

    if len(orig_lead) != 1:
        out = out.reshape(*orig_lead, out_dim)
    return out


def rl_projection(x, w, b, gamma, beta, *, tile_b=None, tile_k=None):
    """Convenience wrapper for a PyTorch-layout weight w: (out_dim, in_dim).

    For hot loops, pre-transpose the weight (and optionally cast x / wt to
    bf16) and pre-pack params once, then call rl_projection_wt directly."""
    wt = jnp.asarray(w).T                                       # (in_dim, out_dim)
    params = jnp.stack([jnp.asarray(b), jnp.asarray(gamma),
                        jnp.asarray(beta)]).astype(jnp.float32)  # (3, out_dim)
    return rl_projection_wt(x, wt, params, tile_b=tile_b, tile_k=tile_k)


def init_params(key, in_dim, out_dim):
    """Mirror weight_init: orthogonal Linear weight, zero bias.
    LayerNorm defaults: gamma=1, beta=0."""
    w = jax.nn.initializers.orthogonal()(key, (out_dim, in_dim), jnp.float32)
    b = jnp.zeros((out_dim,), jnp.float32)
    gamma = jnp.ones((out_dim,), jnp.float32)
    beta = jnp.zeros((out_dim,), jnp.float32)
    return w, b, gamma, beta


def reference(x, w, b, gamma, beta):
    y = x @ w.T + b
    mean = jnp.mean(y, axis=-1, keepdims=True)
    var = jnp.mean((y - mean) ** 2, axis=-1, keepdims=True)
    y = (y - mean) * lax.rsqrt(var + 1e-5) * gamma + beta
    return jnp.tanh(y)


if __name__ == "__main__":
    key = jax.random.PRNGKey(0)
    k1, k2, k3, k4 = jax.random.split(key, 4)

    # Case 1: f32, ragged batch (masked tail block + >=2 batch grid steps).
    in_dim, out_dim = 64, 128
    w, b, gamma, beta = init_params(k1, in_dim, out_dim)
    x = jax.random.normal(k2, (20, in_dim), jnp.float32)
    out = jax.block_until_ready(rl_projection(x, w, b, gamma, beta))
    ref = reference(x, w, b, gamma, beta)
    assert out.shape == (20, out_dim)
    assert jnp.max(jnp.abs(out - ref)) < 1e-5

    # Case 2: bf16 fast path (bf16 MXU operands, f32 stats/affine, bf16 store).
    xb = x.astype(jnp.bfloat16)
    wb = w.astype(jnp.bfloat16)
    outb = jax.block_until_ready(rl_projection(xb, wb, b, gamma, beta))
    refb = reference(xb.astype(jnp.float32), wb.astype(jnp.float32), b, gamma, beta)
    assert outb.dtype == jnp.bfloat16
    assert jnp.max(jnp.abs(outb.astype(jnp.float32) - refb)) < 2e-2

    # Case 3: forced K-tiling (f32 accumulator across K grid steps).
    in_dim2 = 256
    w2, b2, g2, be2 = init_params(k3, in_dim2, out_dim)
    x2 = jax.random.normal(k4, (32, in_dim2), jnp.float32)
    out2 = jax.block_until_ready(rl_projection(x2, w2, b2, g2, be2, tile_k=128))
    ref2 = reference(x2, w2, b2, g2, be2)
    assert out2.shape == (32, out_dim)
    assert jnp.max(jnp.abs(out2 - ref2)) < 1e-5

    print("KERNEL_OK")
</pallas_src>

<mosaic_0001>
module attributes {stable_mosaic.version = 11 : i64} {
  func.func @_rl_projection_kernel(%arg0: i32, %arg1: i32, %arg2: memref<16x64xf32, #tpu.memory_space<vmem>>, %arg3: memref<64x128xf32, #tpu.memory_space<vmem>>, %arg4: memref<3x128xf32, #tpu.memory_space<vmem>>, %arg5: memref<16x128xf32, #tpu.memory_space<vmem>>, %arg6: memref<16x128xf32, #tpu.memory_space<vmem>>) attributes {dimension_semantics = [#tpu.dimension_semantics<parallel>, #tpu.dimension_semantics<arbitrary>], iteration_bounds = array<i64: 2, 1>, scalar_prefetch = 0 : i64, scratch_operands = 1 : i64, tpu.core_type = #tpu.core_type<tc>, window_params = [{transform_indices = @transform_0, window_bounds = array<i64: 16, 64>}, {transform_indices = @transform_1, window_bounds = array<i64: 64, 128>}, {pipeline_mode = #tpu.pipeline_mode<synchronous>, transform_indices = @transform_2, window_bounds = array<i64: 3, 128>}, {transform_indices = @transform_3, window_bounds = array<i64: 16, 128>}]} {
    %c0_i32 = arith.constant 0 : i32
    %0 = arith.cmpi eq, %arg1, %c0_i32 : i32
    %1 = arith.extui %0 : i1 to i32
    %c0_i32_0 = arith.constant 0 : i32
    %2 = arith.cmpi ne, %1, %c0_i32_0 : i32
    scf.if %2 {
      %cst_10 = arith.constant 0.000000e+00 : f32
      %12 = vector.broadcast %cst_10 : f32 to vector<16x128xf32>
      %c0_11 = arith.constant 0 : index
      %c0_12 = arith.constant 0 : index
      %13 = vector.load %arg6[%c0_11, %c0_12] : memref<16x128xf32, #tpu.memory_space<vmem>>, vector<16x128xf32>
      tpu.vector_store %arg6[%c0_11, %c0_12], %12 {strides = array<i32>} : memref<16x128xf32, #tpu.memory_space<vmem>>, vector<16x128xf32>,
    } else {
    }
    %c0 = arith.constant 0 : index
    %c0_1 = arith.constant 0 : index
    %3 = vector.load %arg6[%c0, %c0_1] : memref<16x128xf32, #tpu.memory_space<vmem>>, vector<16x128xf32>
    %c0_2 = arith.constant 0 : index
    %c0_3 = arith.constant 0 : index
    %4 = vector.load %arg2[%c0_2, %c0_3] : memref<16x64xf32, #tpu.memory_space<vmem>>, vector<16x64xf32>
    %c0_4 = arith.constant 0 : index
    %c0_5 = arith.constant 0 : index
    %5 = vector.load %arg3[%c0_4, %c0_5] : memref<64x128xf32, #tpu.memory_space<vmem>>, vector<64x128xf32>
    %cst = arith.constant dense<0.000000e+00> : vector<16x128xf32>
    %6 = tpu.matmul %4, %5, %cst {dimension_numbers = #tpu.dot_dimension_numbers<[1], [0], [0], [1], [0, 0, 1, 1], [], []>} : vector<16x64xf32>, vector<64x128xf32>, vector<16x128xf32> -> vector<16x128xf32>
    %7 = arith.addf %3, %6 : vector<16x128xf32>
    %c0_6 = arith.constant 0 : index
    %c0_7 = arith.constant 0 : index
    %8 = vector.load %arg6[%c0_6, %c0_7] : memref<16x128xf32, #tpu.memory_space<vmem>>, vector<16x128xf32>
    tpu.vector_store %arg6[%c0_6, %c0_7], %7 {strides = array<i32>} : memref<16x128xf32, #tpu.memory_space<vmem>>, vector<16x128xf32>,
    %c0_i32_8 = arith.constant 0 : i32
    %9 = arith.cmpi eq, %arg1, %c0_i32_8 : i32
    %10 = arith.extui %9 : i1 to i32
    %c0_i32_9 = arith.constant 0 : i32
    %11 = arith.cmpi ne, %10, %c0_i32_9 : i32
    scf.if %11 {
      %c0_10 = arith.constant 0 : index
      %c0_11 = arith.constant 0 : index
      %12 = vector.load %arg6[%c0_10, %c0_11] : memref<16x128xf32, #tpu.memory_space<vmem>>, vector<16x128xf32>
      %c0_12 = arith.constant 0 : index
      %c0_13 = arith.constant 0 : index
      %13 = vector.load %arg4[%c0_12, %c0_13] : memref<3x128xf32, #tpu.memory_space<vmem>>, vector<1x128xf32>
      %14 = vector.broadcast %13 : vector<1x128xf32> to vector<16x128xf32>
      %15 = arith.addf %12, %14 : vector<16x128xf32>
      %cst_14 = arith.constant dense<0.000000e+00> : vector<16xf32>
      %16 = vector.multi_reduction <add>, %15, %cst_14 [1] : vector<16x128xf32> to vector<16xf32>
      %17 = vector.shape_cast %16 : vector<16xf32> to vector<16x1xf32>
      %18 = arith.mulf %15, %15 : vector<16x128xf32>
      %cst_15 = arith.constant dense<0.000000e+00> : vector<16xf32>
      %19 = vector.multi_reduction <add>, %18, %cst_15 [1] : vector<16x128xf32> to vector<16xf32>
      %20 = vector.shape_cast %19 : vector<16xf32> to vector<16x1xf32>
      %cst_16 = arith.constant 7.812500e-03 : f32
      %21 = vector.broadcast %cst_16 : f32 to vector<16x1xf32>
      %22 = arith.mulf %17, %21 : vector<16x1xf32>
      %cst_17 = arith.constant 7.812500e-03 : f32
      %23 = vector.broadcast %cst_17 : f32 to vector<16x1xf32>
      %24 = arith.mulf %20, %23 : vector<16x1xf32>
      %25 = arith.mulf %22, %22 : vector<16x1xf32>
      %26 = arith.subf %24, %25 : vector<16x1xf32>
      %cst_18 = arith.constant 0.000000e+00 : f32
      %27 = vector.broadcast %cst_18 : f32 to vector<16x1xf32>
      %28 = arith.maximumf %26, %27 : vector<16x1xf32>
      %29 = vector.broadcast %22 : vector<16x1xf32> to vector<16x128xf32>
      %30 = arith.subf %15, %29 : vector<16x128xf32>
      %cst_19 = arith.constant 9.99999974E-6 : f32
      %31 = vector.broadcast %cst_19 : f32 to vector<16x1xf32>
      %32 = arith.addf %28, %31 : vector<16x1xf32>
      %33 = math.rsqrt %32 : vector<16x1xf32>
      %34 = vector.broadcast %33 : vector<16x1xf32> to vector<16x128xf32>
      %35 = arith.mulf %30, %34 : vector<16x128xf32>
      %c1 = arith.constant 1 : index
      %c0_20 = arith.constant 0 : index
      %36 = vector.load %arg4[%c1, %c0_20] : memref<3x128xf32, #tpu.memory_space<vmem>>, vector<1x128xf32>
      %37 = vector.broadcast %36 : vector<1x128xf32> to vector<16x128xf32>
      %38 = arith.mulf %35, %37 : vector<16x128xf32>
      %c2 = arith.constant 2 : index
      %c0_21 = arith.constant 0 : index
      %39 = vector.load %arg4[%c2, %c0_21] : memref<3x128xf32, #tpu.memory_space<vmem>>, vector<1x128xf32>
      %40 = vector.broadcast %39 : vector<1x128xf32> to vector<16x128xf32>
      %41 = arith.addf %38, %40 : vector<16x128xf32>
      %42 = math.tanh %41 : vector<16x128xf32>
      %c0_22 = arith.constant 0 : index
      %c0_23 = arith.constant 0 : index
      %43 = vector.load %arg5[%c0_22, %c0_23] : memref<16x128xf32, #tpu.memory_space<vmem>>, vector<16x128xf32>
      tpu.vector_store %arg5[%c0_22, %c0_23], %42 {strides = array<i32>} : memref<16x128xf32, #tpu.memory_space<vmem>>, vector<16x128xf32>,
    } else {
    }
    return
  }
  func.func @transform_0(%arg0: i32, %arg1: i32) -> (i32, i32) {
    %c0_i32 = arith.constant 0 : i32
    return %arg0, %arg1 : i32, i32
  }
  func.func @transform_1(%arg0: i32, %arg1: i32) -> (i32, i32) {
    %c0_i32 = arith.constant 0 : i32
    %c0_i32_0 = arith.constant 0 : i32
    return %arg1, %c0_i32 : i32, i32
  }
  func.func @transform_2(%arg0: i32, %arg1: i32) -> (i32, i32) {
    %c0_i32 = arith.constant 0 : i32
    %c0_i32_0 = arith.constant 0 : i32
    %c0_i32_1 = arith.constant 0 : i32
    return %c0_i32, %c0_i32_0 : i32, i32
  }
  func.func @transform_3(%arg0: i32, %arg1: i32) -> (i32, i32) {
    %c0_i32 = arith.constant 0 : i32
    %c0_i32_0 = arith.constant 0 : i32
    return %arg0, %c0_i32 : i32, i32
  }
}

</mosaic_0001>

<llo_original>
// kernel: rl_projection_wt.1
$region0: #{rl_projection_wt.1}
  #allocation0 [shape = 'u32[]', space=smem, size = 0x4, offset = 0x4, fixed_abs, tag = 'smem constant byte address 0x4 - core index']
  #allocation1 [shape = 'u32[72,128]{1,0:T(1,128)}', space=vmem, size = 0x9000, scoped, tag = 'internal scratch']
  #allocation2 [shape = 'f32[16,128]{1,0:T(8,128)}', space=vmem, size = 0x2000, scoped, tag = 'scratch operand']
  %s0 = inlined_call_operand.hbm [shape: f32[20,64], index: 0, kind: input, shape index: {}]
  %s1 = inlined_call_operand.hbm [shape: f32[64,128], index: 1, kind: input, shape index: {}]
  %s2 = inlined_call_operand.hbm [shape: f32[3,128], index: 2, kind: input, shape index: {}]
  %s3 = inlined_call_operand.hbm [shape: f32[20,128], index: 3, kind: output, shape index: {}]
  %s4 = sld [smem:[#allocation0]]
  $region65: #{rl_projection_wt.1} parent=0
    _
  %s6 = ssub.s32 1, %s4
  %s7 = scalar_select 0, %s6, %s4
  $region1: #{rl_projection_wt.1} parent=0
    #allocation3 [shape = 'u8[16384]{0}', space=vmem, size = 0x4000, scoped, tag = 'input window, operand 0']
    #allocation4 [shape = 's32[2]{0}', space=sflag, size = 0x8, scoped, tag = 'scoped memory for rl_projection_wt.1']
    #allocation5 [shape = 's32[2]{0}', space=sflag, size = 0x8, scoped, tag = 'scoped memory for rl_projection_wt.1']
    #allocation6 [shape = 'u8[32768]{0}', space=vmem, size = 0x8000, scoped, tag = 'input window, operand 1, single buffered']
    #allocation7 [shape = 's32[1]{0}', space=sflag, size = 0x4, scoped, tag = 'scoped memory for rl_projection_wt.1']
    #allocation8 [shape = 'u8[2048]{0}', space=vmem, size = 0x800, scoped, tag = 'input window, operand 2, single buffered']
    #allocation9 [shape = 'u8[16384]{0}', space=vmem, size = 0x4000, scoped, tag = 'output window, operand 0']
    %8 = vsyncpa [#allocation4], 0
    %s9 = scalar_lea.sflag [#allocation4], 1
    %10 = vsyncpa %s9, 0
    %11 = vsyncpa [#allocation7], 0
    %12 = vsyncpa [#allocation5], 0
    %s13 = scalar_lea.sflag [#allocation5], 1
    %14 = vsyncpa %s13, 0
    loop: start=0, step=1, limit=4
    $region2: #{rl_projection_wt.1} parent=1 // loop_pre_header
      _
    $region3: #{rl_projection_wt.1} parent=1 // loop_header
      %s16 = sphi 0, %s20
      %p17 = scmp.ge.s32.totalorder %s16, 4
      %s23 = sphi 0, %s35
      %s24 = sphi 0, %s31
      %s25 = sphi 0, %s23
      %s26 = sphi 0, %s24
      %s27 = sphi 0, %s25
      %s28 = sphi 0, %s26
      %s40 = sphi 0, %s42
      %s43 = sphi 0, %s40
      %s44 = sphi 0, %s43
      %s60 = sphi 0, %s44
      %s66 = sphi 0, %s68
      %s69 = sphi 0, %s66
      %s70 = sphi 0, %s69
      %s86 = sphi 0, %s70
      %s90 = sphi 0, %s90
      %s92 = sphi 0, %s90
      %s93 = sphi 0, %s92
      %s107 = sphi 0, %s93
      %s113 = sphi 0, %s115
      %s116 = sphi 0, %s113
      %s117 = sphi 0, %s116
      %s133 = sphi 0, %s117
    $region4: #{rl_projection_wt.1} parent=1 // loop_header_branch
      %19 = sbr.rel (%p17) target = $region8
    $region5: #{rl_projection_wt.1} parent=1 // loop_body
      %s21 = ssub.s32 %s16, 1
      %s22 = ssub.s32 %s16, 2
      %s29 = sadd.s32 1, %s24
      %p30 = scmp.ge.s32.totalorder %s29, 1
      %s31 = scalar_select %p30, 0, %s29
      %s32 = sadd.s32 1, %s23
      %s33 = scalar_select %p30, %s32, %s23
      %p34 = scmp.ge.s32.totalorder %s33, 2
      %s35 = scalar_select %p34, 0, %s33
      %s36 = ssub.s32 %s23, %s35
      %s37 = ssub.s32 %s24, %s31
      %s38 = sor.u32 %s36, %s37
      %p39 = scmp.eq.s32.totalorder %s38, 0
      %s41 = sadd.s32 %s40, 1
      %s42 = scalar_select %p39, %s40, %s41
      %p45 = pneg %p39
      %p46 = scmp.eq.s32.totalorder %s16, 1
      %p47 = por %p45, %p46
      %p48 = scmp.ne.s32.totalorder %s40, %s43
      %p49 = scmp.eq.s32.totalorder %s16, 0
      %p50 = por %p48, %p49
      %p51 = scmp.ne.s32.totalorder %s40, %s43
      %p52 = scmp.eq.s32.totalorder %s21, 1
      %p53 = por %p51, %p52
      %p54 = scmp.ne.s32.totalorder %s43, %s44
      %p55 = scmp.eq.s32.totalorder %s21, 0
      %p56 = por %p54, %p55
      %p57 = scmp.ne.s32.totalorder %s43, %s44
      %p58 = scmp.eq.s32.totalorder %s22, 1
      %p59 = por %p57, %p58
      %p61 = scmp.ne.s32.totalorder %s44, %s60
      %p62 = scmp.eq.s32.totalorder %s22, 0
      %p63 = por %p61, %p62
      %s64 = ssub.s32 %s24, %s31
      %p65 = scmp.eq.s32.totalorder %s64, 0
      %s67 = sadd.s32 %s66, 1
      %s68 = scalar_select %p65, %s66, %s67
      %p71 = pneg %p65
      %p72 = scmp.eq.s32.totalorder %s16, 1
      %p73 = por %p71, %p72
      %p74 = scmp.ne.s32.totalorder %s66, %s69
      %p75 = scmp.eq.s32.totalorder %s16, 0
      %p76 = por %p74, %p75
      %p77 = scmp.ne.s32.totalorder %s66, %s69
      %p78 = scmp.eq.s32.totalorder %s21, 1
      %p79 = por %p77, %p78
      %p80 = scmp.ne.s32.totalorder %s69, %s70
      %p81 = scmp.eq.s32.totalorder %s21, 0
      %p82 = por %p80, %p81
      %p83 = scmp.ne.s32.totalorder %s69, %s70
      %p84 = scmp.eq.s32.totalorder %s22, 1
      %p85 = por %p83, %p84
      %p87 = scmp.ne.s32.totalorder %s70, %s86
      %p88 = scmp.eq.s32.totalorder %s22, 0
      %p89 = por %p87, %p88
      %s91 = sadd.s32 %s90, 1
      %p94 = scmp.eq.s32.totalorder %s16, 1
      %p95 = scmp.ne.s32.totalorder %s90, %s92
      %p96 = scmp.eq.s32.totalorder %s16, 0
      %p97 = por %p95, %p96
      %p98 = scmp.ne.s32.totalorder %s90, %s92
      %p99 = scmp.eq.s32.totalorder %s21, 1
      %p100 = por %p98, %p99
      %p101 = scmp.ne.s32.totalorder %s92, %s93
      %p102 = scmp.eq.s32.totalorder %s21, 0
      %p103 = por %p101, %p102
      %p104 = scmp.ne.s32.totalorder %s92, %s93
      %p105 = scmp.eq.s32.totalorder %s22, 1
      %p106 = por %p104, %p105
      %p108 = scmp.ne.s32.totalorder %s93, %s107
      %p109 = scmp.eq.s32.totalorder %s22, 0
      %p110 = por %p108, %p109
      %s111 = ssub.s32 %s23, %s35
      %p112 = scmp.eq.s32.totalorder %s111, 0
      %s114 = sadd.s32 %s113, 1
      %s115 = scalar_select %p112, %s113, %s114
      %p118 = pneg %p112
      %p119 = scmp.eq.s32.totalorder %s16, 1
      %p120 = por %p118, %p119
      %p121 = scmp.ne.s32.totalorder %s113, %s116
      %p122 = scmp.eq.s32.totalorder %s16, 0
      %p123 = por %p121, %p122
      %p124 = scmp.ne.s32.totalorder %s113, %s116
      %p125 = scmp.eq.s32.totalorder %s21, 1
      %p126 = por %p124, %p125
      %p127 = scmp.ne.s32.totalorder %s116, %s117
      %p128 = scmp.eq.s32.totalorder %s21, 0
      %p129 = por %p127, %p128
      %p130 = scmp.ne.s32.totalorder %s116, %s117
      %p131 = scmp.eq.s32.totalorder %s22, 1
      %p132 = por %p130, %p131
      %p134 = scmp.ne.s32.totalorder %s117, %s133
      %p135 = scmp.eq.s32.totalorder %s22, 0
      %p136 = por %p134, %p135
      %p137 = scmp.le.s32.totalorder 1, %s16
      %p138 = scmp.lt.s32.totalorder %s16, 3
      %p139 = pnand %p137, %p138
      %p140 = pneg %p139
      // Predicated region
      $region9: #{rl_projection_wt.1} parent=5 // pred_check
        _
      $region10: #{rl_projection_wt.1} parent=5 // pred_check_branch
        %142 = sbr.rel (%p139) target = $region12
      $region11: #{rl_projection_wt.1} parent=5 // pred_region
        %s143 = ssub.s32 %s16, 1
        // Predicated region
        $region13: #{rl_projection_wt.1} parent=11 // pred_check
          %p144 = pneg %p82
        $region14: #{rl_projection_wt.1} parent=11 // pred_check_branch
          %146 = sbr.rel (%p144) target = $region16
        $region15: #{rl_projection_wt.1} parent=11 // pred_region
          %s147 = smul.u32 8, %s26
          %149 = vsyncadd [#allocation7], 0
          %s150 = smul.addr %s147, 8
          %s151 = scalar_lea.hbm %s1, %s150
          %s152 = sshll.u32 %s151, 4
          %s153 = int_to_ptr.hbm [resolvable:$true] %s152
          %s154 = sshll.u32 [#allocation6], 4
          %s155 = int_to_ptr.vmem [resolvable:$true] %s154
          %160 = dma.hbm_to_vmem [thread:$0]  %s153, 1024, %s155, [#allocation7], 128, 128, 8
        $region16: #{rl_projection_wt.1} parent=11 // pred_fallthru
          _
        // Predicated region
        $region17: #{rl_projection_wt.1} parent=11 // pred_check
          %p161 = pneg %p103
        $region18: #{rl_projection_wt.1} parent=11 // pred_check_branch
          %163 = sbr.rel (%p161) target = $region20
        $region19: #{rl_projection_wt.1} parent=11 // pred_region
          %165 = vsyncadd [#allocation7], 0
          %s167 = sshll.u32 %s2, 4
          %s168 = int_to_ptr.hbm [resolvable:$true] %s167
          %s169 = sshll.u32 [#allocation8], 4
          %s170 = int_to_ptr.vmem [resolvable:$true] %s169
          %172 = dma.hbm_to_vmem [thread:$0]  %s168, 64, %s170, [#allocation7]
        $region20: #{rl_projection_wt.1} parent=11 // pred_fallthru
          _
      $region12: #{rl_projection_wt.1} parent=5 // pred_fallthru
        _
      %p173 = scmp.lt.s32.totalorder %s16, 2
      // Predicated region
      $region21: #{rl_projection_wt.1} parent=5 // pred_check
        %p174 = pneg %p173
      $region22: #{rl_projection_wt.1} parent=5 // pred_check_branch
        %176 = sbr.rel (%p174) target = $region24
      $region23: #{rl_projection_wt.1} parent=5 // pred_region
        // Predicated region
        $region25: #{rl_projection_wt.1} parent=23 // pred_check
          %p177 = pneg %p50
        $region26: #{rl_projection_wt.1} parent=23 // pred_check_branch
          %179 = sbr.rel (%p177) target = $region28
        $region27: #{rl_projection_wt.1} parent=23 // pred_region
          %s180 = sand.u32 %s40, 1
          %s181 = scalar_lea.sflag [#allocation4], %s180
          %s182 = sand.u32 %s40, 1
          %s183 = smul.addr %s182, 16
          %s184 = scalar_lea.vmem [#allocation3], %s183
          %s185 = smul.u32 2, %s23
          %s186 = ssub.s32 3, %s185
          %p187 = scmp.lt.s32.totalorder %s186, 2
          %s188 = scalar_select %p187, %s186, 2
          %s189 = smul.u32 8, %s188
          %s190 = ssub.s32 16, %s189
          %s191 = sshll.u32 %s190, 4
          %192 = vsyncadd %s181, %s191
          %p193 = scmp.ne.s32.totalorder 0, %s189
          %s194 = sadd.s32 %s24, %s185
          %s195 = smul.addr %s194, 8
          %s196 = scalar_lea.hbm %s0, %s195
          %s197 = smul.u32 8, %s188
          %s198 = sshll.u32 %s196, 4
          %s199 = int_to_ptr.hbm [resolvable:$true] %s198
          %s200 = sshll.u32 %s184, 4
          %s201 = int_to_ptr.vmem [resolvable:$true] %s200
          %s202 = sshll.u32 %s197, 4
          %206 = dma.hbm_to_vmem [thread:$0]  (%p193), %s199, %s202, %s201, %s181, 128, 128, 8
        $region28: #{rl_projection_wt.1} parent=23 // pred_fallthru
          _
      $region24: #{rl_projection_wt.1} parent=5 // pred_fallthru
        _
      %p207 = scmp.le.s32.totalorder 1, %s16
      %p208 = scmp.lt.s32.totalorder %s16, 3
      %p209 = pnand %p207, %p208
      %p210 = pneg %p209
      // Predicated region
      $region29: #{rl_projection_wt.1} parent=5 // pred_check
        _
      $region30: #{rl_projection_wt.1} parent=5 // pred_check_branch
        %212 = sbr.rel (%p209) target = $region32
      $region31: #{rl_projection_wt.1} parent=5 // pred_region
        %s213 = ssub.s32 %s16, 1
        %s214 = sand.u32 %s43, 1
        %s215 = scalar_lea.sflag [#allocation4], %s214
        %s216 = sand.u32 %s43, 1
        %s217 = smul.addr %s216, 16
        %s218 = scalar_lea.vmem [#allocation3], %s217
        // Predicated region
        $region33: #{rl_projection_wt.1} parent=31 // pred_check
          %p219 = pneg %p56
        $region34: #{rl_projection_wt.1} parent=31 // pred_check_branch
          %221 = sbr.rel (%p219) target = $region36
        $region35: #{rl_projection_wt.1} parent=31 // pred_region
          %223 = dma.done %s215, 256
        $region36: #{rl_projection_wt.1} parent=31 // pred_fallthru
          _
        // Predicated region
        $region37: #{rl_projection_wt.1} parent=31 // pred_check
          %p224 = pneg %p82
        $region38: #{rl_projection_wt.1} parent=31 // pred_check_branch
          %226 = sbr.rel (%p224) target = $region40
        $region39: #{rl_projection_wt.1} parent=31 // pred_region
          %228 = dma.done [#allocation7], 1024
        $region40: #{rl_projection_wt.1} parent=31 // pred_fallthru
          _
        // Predicated region
        $region41: #{rl_projection_wt.1} parent=31 // pred_check
          %p229 = pneg %p103
        $region42: #{rl_projection_wt.1} parent=31 // pred_check_branch
          %231 = sbr.rel (%p229) target = $region44
        $region43: #{rl_projection_wt.1} parent=31 // pred_region
          %233 = dma.done [#allocation7], 64
        $region44: #{rl_projection_wt.1} parent=31 // pred_fallthru
          _
        %s234 = sand.u32 %s43, 1
        %s235 = scalar_lea.sflag [#allocation4], %s234
        %s236 = sand.u32 %s43, 1
        %s237 = smul.addr %s236, 16
        %s238 = scalar_lea.vmem [#allocation3], %s237
        %p239 = pneg %p56
        %p240 = pneg %p53
        %p241 = pneg %p82
        %p242 = pneg %p79
        %p243 = pneg %p103
        %p244 = pneg %p100
        %p245 = pneg %p129
        %p246 = pneg %p126
        %s247 = sand.u32 %s116, 1
        %s248 = scalar_lea.sflag [#allocation5], %s247
        %s249 = sand.u32 %s116, 1
        %s250 = smul.addr %s249, 16
        %s251 = scalar_lea.vmem [#allocation9], %s250
        %s252 = smul.u32 2, %s25
        %s253 = ssub.s32 3, %s252
        %p254 = scmp.lt.s32.totalorder %s253, 2
        %s255 = scalar_select %p254, %s253, 2
        %s256 = smul.u32 8, %s255
        %s257 = smul.u32 8, %s26
        %s258 = smul.u32 2, %s25
        %s259 = ssub.s32 3, %s258
        %p260 = scmp.lt.s32.totalorder %s259, 2
        %s261 = scalar_select %p260, %s259, 2
        %s262 = smul.u32 8, %s261
        %p263 = scmp.eq.s32.totalorder %s26, 0
        // Predicated region
        $region45: #{rl_projection_wt.1} parent=31 // pred_check
          %p264 = pneg %p263
        $region46: #{rl_projection_wt.1} parent=31 // pred_check_branch
          %266 = sbr.rel (%p264) target = $region48
        $region47: #{rl_projection_wt.1} parent=31 // pred_region
          %267 = vst [vmem:[#allocation2] sm:$0xff] 0.0
          %268 = vst [vmem:[#allocation2 + $0x8] sm:$0xff] 0.0
        $region48: #{rl_projection_wt.1} parent=31 // pred_fallthru
          _
        %v269 = vld [vmem:[#allocation2] sm:$0xff]
        %v270 = vld [vmem:[#allocation2 + $0x8] sm:$0xff]
        %v271 = vld [vmem:[%s218] sm:$0xff]
        %v272 = vld [vmem:[%s218 + $0x8] sm:$0xff]
        %v273 = vld [vmem:[#allocation6] sm:$0xff]
        %v274 = vld [vmem:[#allocation6 + $0x8] sm:$0xff]
        %v275 = vld [vmem:[#allocation6 + $0x10] sm:$0xff]
        %v276 = vld [vmem:[#allocation6 + $0x18] sm:$0xff]
        %v277 = vld [vmem:[#allocation6 + $0x20] sm:$0xff]
        %v278 = vld [vmem:[#allocation6 + $0x28] sm:$0xff]
        %v279 = vld [vmem:[#allocation6 + $0x30] sm:$0xff]
        %v280 = vld [vmem:[#allocation6 + $0x38] sm:$0xff]
        %vm281 = vcmask 523264
        %v283 = vsel %vm281, %v271, 0
        %v286 = vsel %vm281, %v272, 0
        %288 = vmatpush.msra.mxu0 0.0
        %289 = vmatpush.msra.mxu0 0.0
        %290 = vmatpush.msra.mxu0 0.0
        %291 = vmatpush.msra.mxu0 0.0
        %292 = vmatpush.msra.mxu0 0.0
        %293 = vmatpush.msra.mxu0 0.0
        %294 = vmatpush.msra.mxu0 0.0
        %295 = vmatpush.msra.mxu0 0.0
        %296 = vmatpush.msra.mxu0 %v280
        %297 = vmatpush.msra.mxu0 %v279
        %298 = vmatpush.msra.mxu0 %v278
        %299 = vmatpush.msra.mxu0 %v277
        %300 = vmatpush.msra.mxu0 %v276
        %301 = vmatpush.msra.mxu0 %v275
        %302 = vmatpush.msra.mxu0 %v274
        %303 = vmatpush.msra.mxu0 %v273
        %304 = vmatmul.f32.gmra.mxu0 %v283
        %v305 = vpop.f32.mrf.mxu0
        %v306 = vadd.f32 0.0, %v305
        %307 = vmatmul.f32.gmra.mxu0 %v286
        %v308 = vpop.f32.mrf.mxu0
        %v309 = vadd.f32 0.0, %v308
        %310 = vdwg.mxu0
        %v311 = vadd.f32 %v269, %v306
        %v312 = vadd.f32 %v270, %v309
        %313 = vst [vmem:[#allocation2] sm:$0xff] %v311
        %314 = vst [vmem:[#allocation2 + $0x8] sm:$0xff] %v312
        // Predicated region
        $region49: #{rl_projection_wt.1} parent=31 // pred_check
          %p315 = pneg %p263
        $region50: #{rl_projection_wt.1} parent=31 // pred_check_branch
          %317 = sbr.rel (%p315) target = $region52
        $region51: #{rl_projection_wt.1} parent=31 // pred_region
          %v318 = vld [vmem:[#allocation2] sm:$0xff]
          %v319 = vld [vmem:[#allocation2 + $0x8] sm:$0xff]
          %v320 = vld [vmem:[#allocation8] sm:$0x1]
          %v321 = vperm.slane %v320, 0
          %v322 = vadd.f32 %v318, %v321
          %v323 = vadd.f32 %v319, %v321
          %324 = vadd.xlane.f32.xlu0 %v322
          %v325 = vpop.xlane.xlu0 %324
          %326 = vadd.xlane.f32.xlu0 %v323
          %v327 = vpop.xlane.xlu0 %326
          %v328 = vmul.f32 %v322, %v322
          %v329 = vmul.f32 %v323, %v323
          %330 = vadd.xlane.f32.xlu0 %v328
          %v331 = vpop.xlane.xlu0 %330
          %332 = vadd.xlane.f32.xlu0 %v329
          %v333 = vpop.xlane.xlu0 %332
          %v334 = vmul.f32 %v325, 0.0078125
          %v335 = vmul.f32 %v327, 0.0078125
          %v336 = vmul.f32 %v331, 0.0078125
          %v337 = vmul.f32 %v333, 0.0078125
          %v338 = vmul.f32 %v334, %v334
          %v339 = vmul.f32 %v335, %v335
          %v340 = vsub.f32 %v336, %v338
          %v341 = vsub.f32 %v337, %v339
          %v342 = vmax.f32 %v340, 0.0
          %v343 = vmax.f32 %v341, 0.0
          %v344 = vsub.f32 %v322, %v334
          %v345 = vsub.f32 %v323, %v335
          %v346 = vadd.f32 %v342, 1e-05
          %v347 = vadd.f32 %v343, 1e-05
          %v348 = vrsqrt.pop %v346
          %v349 = vmul.f32 %v348, %v346
          %v350 = vmul.f32 %v349, %v348
          %v351 = vmul.f32 0.5, %v350
          %v352 = vsub.f32 1.5, %v351
          %v353 = vmul.f32 %v348, %v352
          %vm354 = vweird.f32 %v346
          %vm355 = vweird.f32 %v348
          %vm356 = vmor %vm354, %vm355
          %v357 = vsel %vm356, %v348, %v353
          %v358 = vrsqrt.pop %v347
          %v359 = vmul.f32 %v358, %v347
          %v360 = vmul.f32 %v359, %v358
          %v361 = vmul.f32 0.5, %v360
          %v362 = vsub.f32 1.5, %v361
          %v363 = vmul.f32 %v358, %v362
          %vm364 = vweird.f32 %v347
          %vm365 = vweird.f32 %v358
          %vm366 = vmor %vm364, %vm365
          %v367 = vsel %vm366, %v358, %v363
          %v368 = vmul.f32 %v344, %v357
          %v369 = vmul.f32 %v345, %v367
          %v370 = vld [vmem:[#allocation8 + $0x1] sm:$0x1]
          %v371 = vperm.slane %v370, 0
          %v372 = vmul.f32 %v368, %v371
          %v373 = vmul.f32 %v369, %v371
          %v374 = vld [vmem:[#allocation8 + $0x2] sm:$0x1]
          %v375 = vperm.slane %v374, 0
          %v376 = vadd.f32 %v372, %v375
          %v377 = vadd.f32 %v373, %v375
          %v378 = vtanh.pop %v376
          %v379 = vtanh.pop %v377
          %380 = vst [vmem:[%s251] sm:$0xff] %v378
          %381 = vst [vmem:[%s251 + $0x8] sm:$0xff] %v379
        $region52: #{rl_projection_wt.1} parent=31 // pred_fallthru
          _
        %s382 = sand.u32 %s116, 1
        %s383 = scalar_lea.sflag [#allocation5], %s382
        %s384 = sand.u32 %s116, 1
        %s385 = smul.addr %s384, 16
        %s386 = scalar_lea.vmem [#allocation9], %s385
        // Predicated region
        $region53: #{rl_projection_wt.1} parent=31 // pred_check
          %p387 = pneg %p126
        $region54: #{rl_projection_wt.1} parent=31 // pred_check_branch
          %389 = sbr.rel (%p387) target = $region56
        $region55: #{rl_projection_wt.1} parent=31 // pred_region
          %s390 = smul.u32 2, %s25
          %s391 = ssub.s32 3, %s390
          %p392 = scmp.lt.s32.totalorder %s391, 2
          %s393 = scalar_select %p392, %s391, 2
          %s394 = smul.u32 8, %s393
          %s395 = ssub.s32 16, %s394
          %s396 = sshll.u32 %s395, 4
          %397 = vsyncadd %s383, %s396
          %p398 = scmp.ne.s32.totalorder 0, %s394
          %s399 = smul.addr %s390, 8
          %s400 = scalar_lea.hbm %s3, %s399
          %s401 = smul.u32 8, %s393
          %s402 = sshll.u32 %s386, 4
          %s403 = int_to_ptr.vmem [resolvable:$true] %s402
          %s404 = sshll.u32 %s400, 4
          %s405 = int_to_ptr.hbm [resolvable:$true] %s404
          %s406 = sshll.u32 %s401, 4
          %410 = dma.vmem_to_hbm [thread:$0]  (%p398), %s403, %s406, %s405, %s383, 128, 128, 8
        $region56: #{rl_projection_wt.1} parent=31 // pred_fallthru
          _
      $region32: #{rl_projection_wt.1} parent=5 // pred_fallthru
        _
      %p411 = scmp.le.s32.totalorder 2, %s16
      // Predicated region
      $region57: #{rl_projection_wt.1} parent=5 // pred_check
        %p412 = pneg %p411
      $region58: #{rl_projection_wt.1} parent=5 // pred_check_branch
        %414 = sbr.rel (%p412) target = $region60
      $region59: #{rl_projection_wt.1} parent=5 // pred_region
        %s415 = ssub.s32 %s16, 2
        // Predicated region
        $region61: #{rl_projection_wt.1} parent=59 // pred_check
          %p416 = pneg %p132
        $region62: #{rl_projection_wt.1} parent=59 // pred_check_branch
          %418 = sbr.rel (%p416) target = $region64
        $region63: #{rl_projection_wt.1} parent=59 // pred_region
          %s419 = sand.u32 %s117, 1
          %s420 = scalar_lea.sflag [#allocation5], %s419
          %s421 = sand.u32 %s117, 1
          %s422 = smul.addr %s421, 16
          %s423 = scalar_lea.vmem [#allocation9], %s422
          %425 = dma.done %s420, 256
        $region64: #{rl_projection_wt.1} parent=59 // pred_fallthru
          _
      $region60: #{rl_projection_wt.1} parent=5 // pred_fallthru
        _
    $region6: #{rl_projection_wt.1} parent=1 // loop_footer
      %s20 = sadd.s32 1, %s16
    $region7: #{rl_projection_wt.1} parent=1 // loop_footer_branch
      %15 = sbr.rel target = $region3
    $region8: #{rl_projection_wt.1} parent=1 // loop_exit
      _
    %426 = vsyncpa [#allocation4], 1
    %s427 = scalar_lea.sflag [#allocation4], 1
    %428 = vsyncpa %s427, 1
    %429 = vsyncpa [#allocation7], 1
    %430 = vsyncpa [#allocation5], 1
    %s431 = scalar_lea.sflag [#allocation5], 1
    %432 = vsyncpa %s431, 1

</llo_original>
